<compile_context>
chip_gen: v5e
topology: v5e:2x2
jax: 0.10.0
libtpu: 0.0.40
codegen_flags: <defaults>
</compile_context>

<pallas_src>
import functools

import jax
import jax.numpy as jnp
from jax import lax
from jax.experimental import pallas as pl
from jax.experimental.pallas import tpu as pltpu


def _round_up(x, m):
    return (x + m - 1) // m * m


def _conv_kernel(x_ref, w_ref, b_ref, o_ref, *,
                 K, stride, C_in_p, C_out, H_out, W_out, TH, WT,
                 apply_relu, lane_flat_out):
    """One (image n, row-block h) grid step.

    x_ref : (1, S, Hp*C_in_p, Wq)   phase-split, reflection-padded image, bf16
    w_ref : (K, C_out, K*C_in_p)    per-kw weights, (kh, ci) folded into contraction, bf16
    b_ref : (C_out, 1)              bias, f32
    o_ref : (1, 1, C_out, TH*W_out) if lane_flat_out else (1, TH, C_out, W_out)
    """
    S = stride
    h_blk = pl.program_id(1)

    # ---- loop invariants, hoisted once per grid step ----
    w_taps = [w_ref[kw] for kw in range(K)]                       # (C_out, K*C_in_p)
    bias_bcast = jnp.broadcast_to(b_ref[...], (C_out, WT)).astype(jnp.float32)
    w_chunks = [(w0, min(WT, W_out - w0)) for w0 in range(0, W_out, WT)]

    def compute_row(row, store):
        # Clamp tail rows (H_out % TH != 0): in-bounds duplicate work instead of OOB
        # reads; the duplicate rows are sliced off in the wrapper.
        row_c = jnp.minimum(row, H_out - 1)
        r0 = pl.multiple_of(row_c * (stride * C_in_p), 8)
        # one contiguous (K*C_in_p, Wq) sublane slab per W-phase, loaded once per row
        slabs = [x_ref[0, p, pl.ds(r0, K * C_in_p), :] for p in range(S)]
        for (w0, wt) in w_chunks:
            acc = bias_bcast if wt == WT else bias_bcast[:, :wt]
            for kw in range(K):
                p, o = kw % S, kw // S
                sl = slabs[p][:, o + w0: o + w0 + wt]             # (K*C_in_p, wt)
                acc = acc + jnp.dot(w_taps[kw], sl,
                                    preferred_element_type=jnp.float32)
            if apply_relu:
                acc = jnp.maximum(acc, 0.0)
            store(w0, wt, acc.astype(o_ref.dtype))

    if lane_flat_out:
        # Small feature maps (W_out < 128, tiny accumulators): static row loop with
        # static lane-offset stores into one lane-dense (C_out, TH*W_out) output block.
        for th in range(TH):
            def store(w0, wt, v, _th=th):
                lo = _th * W_out + w0
                o_ref[0, 0, :, lo: lo + wt] = v
            compute_row(h_blk * TH + th, store)
    else:
        # Wide rows: fori_loop bounds each row accumulator's live range; W chunking
        # keeps a chunk accumulator <= ~128 KiB of vregs.
        def row_body(th, carry):
            def store(w0, wt, v):
                o_ref[0, pl.ds(th, 1), :, pl.ds(w0, wt)] = v[None]
            compute_row(h_blk * TH + th, store)
            return carry
        lax.fori_loop(0, TH, row_body, 0, unroll=True)


def conv_layer(x, weight, bias, *, kernel_size, stride, is_last=False,
               input_layout="NCHW", output_layout="NCHW", out_dtype=None):
    """Pallas ConvLayer.forward: reflection pad -> Conv2d -> optional ReLU.

    x      : (N, C_in, H, W) if input_layout == "NCHW", else (N, H, C_in, W)
    weight : (C_out, C_in, K, K)   (PyTorch OIHW)
    bias   : (C_out,)
    Compute runs in bf16 with f32 accumulation; output dtype defaults to x.dtype.
    input_layout / output_layout let stacked ConvLayers skip the NCHW<->NHCW transposes.
    """
    K = int(kernel_size)
    S = int(stride)
    pad = K // 2

    if input_layout == "NCHW":
        N, C_in, H, W = x.shape
        x_nhcw = jnp.transpose(x, (0, 2, 1, 3))
    elif input_layout == "NHCW":
        N, H, C_in, W = x.shape
        x_nhcw = x
    else:
        raise ValueError(f"unsupported input_layout {input_layout}")
    C_out = int(weight.shape[0])
    if out_dtype is None:
        out_dtype = x.dtype

    # ReflectionPad2d needs pad < spatial dims (same constraint as PyTorch).
    assert H > pad and W > pad, "spatial dims must exceed kernel_size // 2"

    # ---- wrapper glue (fused by XLA): cast, reflect pad, channel pad, phase split ----
    x_nhcw = x_nhcw.astype(jnp.bfloat16)
    x_nhcw = jnp.pad(x_nhcw, ((0, 0), (pad, pad), (0, 0), (pad, pad)), mode="reflect")
    Hp, Wp = H + 2 * pad, W + 2 * pad
    H_out = (Hp - K) // S + 1
    W_out = (Wp - K) // S + 1

    # pad channels to a sublane multiple so the K-row slab slice is (8, ...)-aligned
    C_in_p = _round_up(C_in, 8)
    if C_in_p != C_in:
        x_nhcw = jnp.pad(x_nhcw, ((0, 0), (0, 0), (0, C_in_p - C_in), (0, 0)))

    # phase-split W by the stride so every in-kernel kw slice is contiguous in lanes
    Wq = (Wp + S - 1) // S
    if Wq * S != Wp:
        x_nhcw = jnp.pad(x_nhcw, ((0, 0), (0, 0), (0, 0), (0, Wq * S - Wp)))
    x_ph = x_nhcw.reshape(N, Hp, C_in_p, Wq, S)
    x_ph = jnp.transpose(x_ph, (0, 4, 1, 2, 3)).reshape(N, S, Hp * C_in_p, Wq)

    # fold kh and channels into the contraction:
    # w_folded[kw, co, kh*C_in_p + ci] = weight[co, ci, kh, kw]
    w = weight.astype(jnp.bfloat16)
    if C_in_p != C_in:
        w = jnp.pad(w, ((0, 0), (0, C_in_p - C_in), (0, 0), (0, 0)))
    w_folded = jnp.transpose(w, (3, 0, 2, 1)).reshape(K, C_out, K * C_in_p)
    b_col = bias.astype(jnp.float32).reshape(C_out, 1)

    # ---- tiling choices ----
    TH = min(8, H_out)
    n_hblk = -(-H_out // TH)
    if N * n_hblk < 2 and H_out > 1:          # keep both v7x TensorCores busy
        TH = -(-H_out // 2)
        n_hblk = -(-H_out // TH)

    # in-kernel W chunking caps a row-chunk f32 accumulator at ~128 KiB of vregs
    if C_out * W_out * 4 <= 128 * 1024:
        WT = W_out
    else:
        WT = max(128, (128 * 1024 // (4 * C_out)) // 128 * 128)
        WT = min(WT, W_out)

    # lane-dense output path for small feature maps (avoids masked partial writeback)
    lane_flat_out = (W_out < 128) and (C_out * W_out * 4 <= 64 * 1024)

    if lane_flat_out:
        out_shape = jax.ShapeDtypeStruct((N, n_hblk, C_out, TH * W_out), out_dtype)
        out_spec = pl.BlockSpec((1, 1, C_out, TH * W_out), lambda n, h: (n, h, 0, 0))
        out_blk_elems = C_out * TH * W_out
    else:
        out_shape = jax.ShapeDtypeStruct((N, n_hblk * TH, C_out, W_out), out_dtype)
        out_spec = pl.BlockSpec((1, TH, C_out, W_out), lambda n, h: (n, h, 0, 0))
        out_blk_elems = TH * C_out * W_out

    # ---- VMEM budget: real footprint, clamped by the device's capacity ----
    img_bytes = S * Hp * C_in_p * Wq * 2            # bf16 image, VMEM-resident per n
    w_bytes = K * C_out * K * C_in_p * 2
    b_bytes = C_out * 4
    out_bytes = out_blk_elems * jnp.dtype(out_dtype).itemsize
    footprint = 2 * (img_bytes + w_bytes + b_bytes + out_bytes) + (4 << 20)
    try:
        info = pltpu.get_tpu_info()
        vmem_cap = int(getattr(info, "vmem_capacity_bytes", 64 << 20))
    except Exception:
        vmem_cap = 64 << 20                         # v7x per-core capacity (worst case)
    vmem_limit = int(min(max(footprint, 32 << 20), int(vmem_cap * 0.85)))
    # TODO(synk): when 2*img_bytes approaches vmem_cap (large images on v7x's 64 MiB
    # VMEM), switch the image input to memory_space=pl.ANY and manually double-buffer
    # (TH*stride + K - 1)-row bands with pltpu.make_async_copy instead of whole-image
    # residency.

    kernel = functools.partial(
        _conv_kernel, K=K, stride=S, C_in_p=C_in_p, C_out=C_out,
        H_out=H_out, W_out=W_out, TH=TH, WT=WT,
        apply_relu=(not is_last), lane_flat_out=lane_flat_out)

    out = pl.pallas_call(
        kernel,
        out_shape=out_shape,
        grid_spec=pltpu.PrefetchScalarGridSpec(
            num_scalar_prefetch=0,
            grid=(N, n_hblk),
            in_specs=[
                # whole phase-split image: DMA'd once per n, resident across h blocks
                pl.BlockSpec((1, S, Hp * C_in_p, Wq), lambda n, h: (n, 0, 0, 0)),
                pl.BlockSpec((K, C_out, K * C_in_p), lambda n, h: (0, 0, 0)),
                pl.BlockSpec((C_out, 1), lambda n, h: (0, 0)),
            ],
            out_specs=out_spec,
        ),
        compiler_params=pltpu.CompilerParams(
            dimension_semantics=("parallel", "parallel"),
            vmem_limit_bytes=vmem_limit,
        ),
    )(x_ph, w_folded, b_col)

    # ---- back to the requested layout (clamped tail rows are cut here) ----
    if lane_flat_out:
        out = out.reshape(N, n_hblk, C_out, TH, W_out)
        if output_layout == "NCHW":
            out = jnp.transpose(out, (0, 2, 1, 3, 4)).reshape(N, C_out, n_hblk * TH, W_out)
            out = out[:, :, :H_out, :]
        elif output_layout == "NHCW":
            out = jnp.transpose(out, (0, 1, 3, 2, 4)).reshape(N, n_hblk * TH, C_out, W_out)
            out = out[:, :H_out]
        else:
            raise ValueError(f"unsupported output_layout {output_layout}")
    else:
        out = out[:, :H_out]                        # (N, H_out, C_out, W_out)
        if output_layout == "NCHW":
            out = jnp.transpose(out, (0, 2, 1, 3))
        elif output_layout != "NHCW":
            raise ValueError(f"unsupported output_layout {output_layout}")
    return out


def _reference(x_nchw, weight, bias, *, kernel_size, stride, is_last):
    """Pure-JAX f32 reference for sanity checking."""
    pad = kernel_size // 2
    xp = jnp.pad(x_nchw, ((0, 0), (0, 0), (pad, pad), (pad, pad)), mode="reflect")
    out = lax.conv_general_dilated(
        xp, weight, window_strides=(stride, stride), padding="VALID",
        dimension_numbers=("NCHW", "OIHW", "NCHW"),
        precision=lax.Precision.HIGHEST)
    out = out + bias[None, :, None, None]
    if not is_last:
        out = jnp.maximum(out, 0.0)
    return out


if __name__ == "__main__":
    def run_case(N, C_in, H, W, C_out, K, stride, is_last, seed):
        key = jax.random.PRNGKey(seed)
        kx, kw, kb = jax.random.split(key, 3)
        x = jax.random.normal(kx, (N, C_in, H, W), jnp.float32)
        fan_in = C_in * K * K
        bound = 1.0 / (fan_in ** 0.5)       # PyTorch Conv2d default init range
        weight = jax.random.uniform(kw, (C_out, C_in, K, K), jnp.float32, -bound, bound)
        bias = jax.random.uniform(kb, (C_out,), jnp.float32, -bound, bound)

        out = conv_layer(x, weight, bias, kernel_size=K, stride=stride, is_last=is_last)
        out = jax.block_until_ready(out)

        pad = K // 2
        H_out = (H + 2 * pad - K) // stride + 1
        W_out = (W + 2 * pad - K) // stride + 1
        assert out.shape == (N, C_out, H_out, W_out), out.shape

        ref = _reference(x, weight, bias, kernel_size=K, stride=stride, is_last=is_last)
        # bf16 inputs with f32 accumulation vs. the f32 reference -> loosened tolerance.
        max_err = float(jnp.max(jnp.abs(out - ref)))
        assert jnp.allclose(out, ref, atol=3e-2, rtol=3e-2), (out.shape, max_err)

    # main case from the module spec (stride 1, lane-dense small-map output path)
    run_case(N=2, C_in=4, H=16, W=16, C_out=8, K=3, stride=1, is_last=False, seed=0)
    # stride-2 path (W phase split) + tail-row clamping + is_last (no ReLU)
    run_case(N=2, C_in=4, H=17, W=9, C_out=8, K=3, stride=2, is_last=True, seed=0)
    # wide-row path: fori_loop over rows, per-row stores, tail-row clamping
    run_case(N=1, C_in=8, H=12, W=256, C_out=8, K=3, stride=1, is_last=False, seed=1)

    print("KERNEL_OK")
</pallas_src>

<mosaic_0001>
module attributes {stable_mosaic.version = 11 : i64} {
  func.func @_conv_kernel(%arg0: i32, %arg1: i32, %arg2: memref<1x1x144x18xbf16, #tpu.memory_space<vmem>>, %arg3: memref<3x8x24xbf16, #tpu.memory_space<vmem>>, %arg4: memref<8x1xf32, #tpu.memory_space<vmem>>, %arg5: memref<1x1x8x128xf32, #tpu.memory_space<vmem>>) attributes {dimension_semantics = [#tpu.dimension_semantics<parallel>, #tpu.dimension_semantics<parallel>], iteration_bounds = array<i64: 2, 2>, scalar_prefetch = 0 : i64, scratch_operands = 0 : i64, tpu.core_type = #tpu.core_type<tc>, window_params = [{transform_indices = @transform_0, window_bounds = array<i64: 1, 1, 144, 18>}, {pipeline_mode = #tpu.pipeline_mode<synchronous>, transform_indices = @transform_1, window_bounds = array<i64: 3, 8, 24>}, {pipeline_mode = #tpu.pipeline_mode<synchronous>, transform_indices = @transform_2, window_bounds = array<i64: 8, 1>}, {transform_indices = @transform_3, window_bounds = array<i64: 1, 1, 8, 128>}]} {
    %c0 = arith.constant 0 : index
    %c0_0 = arith.constant 0 : index
    %c0_1 = arith.constant 0 : index
    %0 = vector.load %arg3[%c0, %c0_0, %c0_1] : memref<3x8x24xbf16, #tpu.memory_space<vmem>>, vector<1x8x24xbf16>
    %1 = vector.shape_cast %0 : vector<1x8x24xbf16> to vector<8x24xbf16>
    %c1 = arith.constant 1 : index
    %c0_2 = arith.constant 0 : index
    %c0_3 = arith.constant 0 : index
    %2 = vector.load %arg3[%c1, %c0_2, %c0_3] : memref<3x8x24xbf16, #tpu.memory_space<vmem>>, vector<1x8x24xbf16>
    %3 = vector.shape_cast %2 : vector<1x8x24xbf16> to vector<8x24xbf16>
    %c2 = arith.constant 2 : index
    %c0_4 = arith.constant 0 : index
    %c0_5 = arith.constant 0 : index
    %4 = vector.load %arg3[%c2, %c0_4, %c0_5] : memref<3x8x24xbf16, #tpu.memory_space<vmem>>, vector<1x8x24xbf16>
    %5 = vector.shape_cast %4 : vector<1x8x24xbf16> to vector<8x24xbf16>
    %c0_6 = arith.constant 0 : index
    %c0_7 = arith.constant 0 : index
    %6 = vector.load %arg4[%c0_6, %c0_7] : memref<8x1xf32, #tpu.memory_space<vmem>>, vector<8x1xf32>
    %7 = vector.shape_cast %6 : vector<8x1xf32> to vector<8x1xf32>
    %8 = vector.broadcast %7 : vector<8x1xf32> to vector<8x16xf32>
    %c8_i32 = arith.constant 8 : i32
    %9 = arith.muli %arg1, %c8_i32 : i32
    %c0_i32 = arith.constant 0 : i32
    %10 = arith.addi %9, %c0_i32 : i32
    %c15_i32 = arith.constant 15 : i32
    %11 = arith.minsi %10, %c15_i32 : i32
    %c8_i32_8 = arith.constant 8 : i32
    %12 = arith.muli %11, %c8_i32_8 : i32
    %13 = tpu.assume_multiple %12, 8 : i32
    %c0_9 = arith.constant 0 : index
    %c0_10 = arith.constant 0 : index
    %14 = arith.index_cast %13 : i32 to index
    %c0_11 = arith.constant 0 : index
    %15 = vector.load %arg2[%c0_9, %c0_10, %14, %c0_11] : memref<1x1x144x18xbf16, #tpu.memory_space<vmem>>, vector<1x1x24x18xbf16>
    %16 = vector.shape_cast %15 : vector<1x1x24x18xbf16> to vector<24x18xbf16>
    %17 = vector.extract_strided_slice %16 {offsets = [0, 0], sizes = [24, 16], strides = [1, 1]} : vector<24x18xbf16> to vector<24x16xbf16>
    %cst = arith.constant dense<0.000000e+00> : vector<8x16xf32>
    %18 = tpu.matmul %1, %17, %cst {dimension_numbers = #tpu.dot_dimension_numbers<[1], [0], [0], [1], [0, 0, 1, 1], [], []>} : vector<8x24xbf16>, vector<24x16xbf16>, vector<8x16xf32> -> vector<8x16xf32>
    %19 = arith.addf %8, %18 : vector<8x16xf32>
    %20 = vector.extract_strided_slice %16 {offsets = [0, 1], sizes = [24, 16], strides = [1, 1]} : vector<24x18xbf16> to vector<24x16xbf16>
    %cst_12 = arith.constant dense<0.000000e+00> : vector<8x16xf32>
    %21 = tpu.matmul %3, %20, %cst_12 {dimension_numbers = #tpu.dot_dimension_numbers<[1], [0], [0], [1], [0, 0, 1, 1], [], []>} : vector<8x24xbf16>, vector<24x16xbf16>, vector<8x16xf32> -> vector<8x16xf32>
    %22 = arith.addf %19, %21 : vector<8x16xf32>
    %23 = vector.extract_strided_slice %16 {offsets = [0, 2], sizes = [24, 16], strides = [1, 1]} : vector<24x18xbf16> to vector<24x16xbf16>
    %cst_13 = arith.constant dense<0.000000e+00> : vector<8x16xf32>
    %24 = tpu.matmul %5, %23, %cst_13 {dimension_numbers = #tpu.dot_dimension_numbers<[1], [0], [0], [1], [0, 0, 1, 1], [], []>} : vector<8x24xbf16>, vector<24x16xbf16>, vector<8x16xf32> -> vector<8x16xf32>
    %25 = arith.addf %22, %24 : vector<8x16xf32>
    %cst_14 = arith.constant 0.000000e+00 : f32
    %26 = vector.broadcast %cst_14 : f32 to vector<8x16xf32>
    %27 = arith.maximumf %25, %26 : vector<8x16xf32>
    %c0_15 = arith.constant 0 : index
    %c0_16 = arith.constant 0 : index
    %c0_17 = arith.constant 0 : index
    %c0_18 = arith.constant 0 : index
    %28 = vector.load %arg5[%c0_15, %c0_16, %c0_17, %c0_18] : memref<1x1x8x128xf32, #tpu.memory_space<vmem>>, vector<1x1x8x16xf32>
    %29 = vector.shape_cast %28 : vector<1x1x8x16xf32> to vector<8x16xf32>
    %30 = vector.shape_cast %27 : vector<8x16xf32> to vector<1x1x8x16xf32>
    tpu.vector_store %arg5[%c0_15, %c0_16, %c0_17, %c0_18], %30 {strides = array<i32>} : memref<1x1x8x128xf32, #tpu.memory_space<vmem>>, vector<1x1x8x16xf32>,
    %c8_i32_19 = arith.constant 8 : i32
    %31 = arith.muli %arg1, %c8_i32_19 : i32
    %c1_i32 = arith.constant 1 : i32
    %32 = arith.addi %31, %c1_i32 : i32
    %c15_i32_20 = arith.constant 15 : i32
    %33 = arith.minsi %32, %c15_i32_20 : i32
    %c8_i32_21 = arith.constant 8 : i32
    %34 = arith.muli %33, %c8_i32_21 : i32
    %35 = tpu.assume_multiple %34, 8 : i32
    %c0_22 = arith.constant 0 : index
    %c0_23 = arith.constant 0 : index
    %36 = arith.index_cast %35 : i32 to index
    %c0_24 = arith.constant 0 : index
    %37 = vector.load %arg2[%c0_22, %c0_23, %36, %c0_24] : memref<1x1x144x18xbf16, #tpu.memory_space<vmem>>, vector<1x1x24x18xbf16>
    %38 = vector.shape_cast %37 : vector<1x1x24x18xbf16> to vector<24x18xbf16>
    %39 = vector.extract_strided_slice %38 {offsets = [0, 0], sizes = [24, 16], strides = [1, 1]} : vector<24x18xbf16> to vector<24x16xbf16>
    %cst_25 = arith.constant dense<0.000000e+00> : vector<8x16xf32>
    %40 = tpu.matmul %1, %39, %cst_25 {dimension_numbers = #tpu.dot_dimension_numbers<[1], [0], [0], [1], [0, 0, 1, 1], [], []>} : vector<8x24xbf16>, vector<24x16xbf16>, vector<8x16xf32> -> vector<8x16xf32>
    %41 = arith.addf %8, %40 : vector<8x16xf32>
    %42 = vector.extract_strided_slice %38 {offsets = [0, 1], sizes = [24, 16], strides = [1, 1]} : vector<24x18xbf16> to vector<24x16xbf16>
    %cst_26 = arith.constant dense<0.000000e+00> : vector<8x16xf32>
    %43 = tpu.matmul %3, %42, %cst_26 {dimension_numbers = #tpu.dot_dimension_numbers<[1], [0], [0], [1], [0, 0, 1, 1], [], []>} : vector<8x24xbf16>, vector<24x16xbf16>, vector<8x16xf32> -> vector<8x16xf32>
    %44 = arith.addf %41, %43 : vector<8x16xf32>
    %45 = vector.extract_strided_slice %38 {offsets = [0, 2], sizes = [24, 16], strides = [1, 1]} : vector<24x18xbf16> to vector<24x16xbf16>
    %cst_27 = arith.constant dense<0.000000e+00> : vector<8x16xf32>
    %46 = tpu.matmul %5, %45, %cst_27 {dimension_numbers = #tpu.dot_dimension_numbers<[1], [0], [0], [1], [0, 0, 1, 1], [], []>} : vector<8x24xbf16>, vector<24x16xbf16>, vector<8x16xf32> -> vector<8x16xf32>
    %47 = arith.addf %44, %46 : vector<8x16xf32>
    %cst_28 = arith.constant 0.000000e+00 : f32
    %48 = vector.broadcast %cst_28 : f32 to vector<8x16xf32>
    %49 = arith.maximumf %47, %48 : vector<8x16xf32>
    %c0_29 = arith.constant 0 : index
    %c0_30 = arith.constant 0 : index
    %c0_31 = arith.constant 0 : index
    %c16 = arith.constant 16 : index
    %50 = vector.load %arg5[%c0_29, %c0_30, %c0_31, %c16] : memref<1x1x8x128xf32, #tpu.memory_space<vmem>>, vector<1x1x8x16xf32>
    %51 = vector.shape_cast %50 : vector<1x1x8x16xf32> to vector<8x16xf32>
    %52 = vector.shape_cast %49 : vector<8x16xf32> to vector<1x1x8x16xf32>
    tpu.vector_store %arg5[%c0_29, %c0_30, %c0_31, %c16], %52 {strides = array<i32>} : memref<1x1x8x128xf32, #tpu.memory_space<vmem>>, vector<1x1x8x16xf32>,
    %c8_i32_32 = arith.constant 8 : i32
    %53 = arith.muli %arg1, %c8_i32_32 : i32
    %c2_i32 = arith.constant 2 : i32
    %54 = arith.addi %53, %c2_i32 : i32
    %c15_i32_33 = arith.constant 15 : i32
    %55 = arith.minsi %54, %c15_i32_33 : i32
    %c8_i32_34 = arith.constant 8 : i32
    %56 = arith.muli %55, %c8_i32_34 : i32
    %57 = tpu.assume_multiple %56, 8 : i32
    %c0_35 = arith.constant 0 : index
    %c0_36 = arith.constant 0 : index
    %58 = arith.index_cast %57 : i32 to index
    %c0_37 = arith.constant 0 : index
    %59 = vector.load %arg2[%c0_35, %c0_36, %58, %c0_37] : memref<1x1x144x18xbf16, #tpu.memory_space<vmem>>, vector<1x1x24x18xbf16>
    %60 = vector.shape_cast %59 : vector<1x1x24x18xbf16> to vector<24x18xbf16>
    %61 = vector.extract_strided_slice %60 {offsets = [0, 0], sizes = [24, 16], strides = [1, 1]} : vector<24x18xbf16> to vector<24x16xbf16>
    %cst_38 = arith.constant dense<0.000000e+00> : vector<8x16xf32>
    %62 = tpu.matmul %1, %61, %cst_38 {dimension_numbers = #tpu.dot_dimension_numbers<[1], [0], [0], [1], [0, 0, 1, 1], [], []>} : vector<8x24xbf16>, vector<24x16xbf16>, vector<8x16xf32> -> vector<8x16xf32>
    %63 = arith.addf %8, %62 : vector<8x16xf32>
    %64 = vector.extract_strided_slice %60 {offsets = [0, 1], sizes = [24, 16], strides = [1, 1]} : vector<24x18xbf16> to vector<24x16xbf16>
    %cst_39 = arith.constant dense<0.000000e+00> : vector<8x16xf32>
    %65 = tpu.matmul %3, %64, %cst_39 {dimension_numbers = #tpu.dot_dimension_numbers<[1], [0], [0], [1], [0, 0, 1, 1], [], []>} : vector<8x24xbf16>, vector<24x16xbf16>, vector<8x16xf32> -> vector<8x16xf32>
    %66 = arith.addf %63, %65 : vector<8x16xf32>
    %67 = vector.extract_strided_slice %60 {offsets = [0, 2], sizes = [24, 16], strides = [1, 1]} : vector<24x18xbf16> to vector<24x16xbf16>
    %cst_40 = arith.constant dense<0.000000e+00> : vector<8x16xf32>
    %68 = tpu.matmul %5, %67, %cst_40 {dimension_numbers = #tpu.dot_dimension_numbers<[1], [0], [0], [1], [0, 0, 1, 1], [], []>} : vector<8x24xbf16>, vector<24x16xbf16>, vector<8x16xf32> -> vector<8x16xf32>
    %69 = arith.addf %66, %68 : vector<8x16xf32>
    %cst_41 = arith.constant 0.000000e+00 : f32
    %70 = vector.broadcast %cst_41 : f32 to vector<8x16xf32>
    %71 = arith.maximumf %69, %70 : vector<8x16xf32>
    %c0_42 = arith.constant 0 : index
    %c0_43 = arith.constant 0 : index
    %c0_44 = arith.constant 0 : index
    %c32 = arith.constant 32 : index
    %72 = vector.load %arg5[%c0_42, %c0_43, %c0_44, %c32] : memref<1x1x8x128xf32, #tpu.memory_space<vmem>>, vector<1x1x8x16xf32>
    %73 = vector.shape_cast %72 : vector<1x1x8x16xf32> to vector<8x16xf32>
    %74 = vector.shape_cast %71 : vector<8x16xf32> to vector<1x1x8x16xf32>
    tpu.vector_store %arg5[%c0_42, %c0_43, %c0_44, %c32], %74 {strides = array<i32>} : memref<1x1x8x128xf32, #tpu.memory_space<vmem>>, vector<1x1x8x16xf32>,
    %c8_i32_45 = arith.constant 8 : i32
    %75 = arith.muli %arg1, %c8_i32_45 : i32
    %c3_i32 = arith.constant 3 : i32
    %76 = arith.addi %75, %c3_i32 : i32
    %c15_i32_46 = arith.constant 15 : i32
    %77 = arith.minsi %76, %c15_i32_46 : i32
    %c8_i32_47 = arith.constant 8 : i32
    %78 = arith.muli %77, %c8_i32_47 : i32
    %79 = tpu.assume_multiple %78, 8 : i32
    %c0_48 = arith.constant 0 : index
    %c0_49 = arith.constant 0 : index
    %80 = arith.index_cast %79 : i32 to index
    %c0_50 = arith.constant 0 : index
    %81 = vector.load %arg2[%c0_48, %c0_49, %80, %c0_50] : memref<1x1x144x18xbf16, #tpu.memory_space<vmem>>, vector<1x1x24x18xbf16>
    %82 = vector.shape_cast %81 : vector<1x1x24x18xbf16> to vector<24x18xbf16>
    %83 = vector.extract_strided_slice %82 {offsets = [0, 0], sizes = [24, 16], strides = [1, 1]} : vector<24x18xbf16> to vector<24x16xbf16>
    %cst_51 = arith.constant dense<0.000000e+00> : vector<8x16xf32>
    %84 = tpu.matmul %1, %83, %cst_51 {dimension_numbers = #tpu.dot_dimension_numbers<[1], [0], [0], [1], [0, 0, 1, 1], [], []>} : vector<8x24xbf16>, vector<24x16xbf16>, vector<8x16xf32> -> vector<8x16xf32>
    %85 = arith.addf %8, %84 : vector<8x16xf32>
    %86 = vector.extract_strided_slice %82 {offsets = [0, 1], sizes = [24, 16], strides = [1, 1]} : vector<24x18xbf16> to vector<24x16xbf16>
    %cst_52 = arith.constant dense<0.000000e+00> : vector<8x16xf32>
    %87 = tpu.matmul %3, %86, %cst_52 {dimension_numbers = #tpu.dot_dimension_numbers<[1], [0], [0], [1], [0, 0, 1, 1], [], []>} : vector<8x24xbf16>, vector<24x16xbf16>, vector<8x16xf32> -> vector<8x16xf32>
    %88 = arith.addf %85, %87 : vector<8x16xf32>
    %89 = vector.extract_strided_slice %82 {offsets = [0, 2], sizes = [24, 16], strides = [1, 1]} : vector<24x18xbf16> to vector<24x16xbf16>
    %cst_53 = arith.constant dense<0.000000e+00> : vector<8x16xf32>
    %90 = tpu.matmul %5, %89, %cst_53 {dimension_numbers = #tpu.dot_dimension_numbers<[1], [0], [0], [1], [0, 0, 1, 1], [], []>} : vector<8x24xbf16>, vector<24x16xbf16>, vector<8x16xf32> -> vector<8x16xf32>
    %91 = arith.addf %88, %90 : vector<8x16xf32>
    %cst_54 = arith.constant 0.000000e+00 : f32
    %92 = vector.broadcast %cst_54 : f32 to vector<8x16xf32>
    %93 = arith.maximumf %91, %92 : vector<8x16xf32>
    %c0_55 = arith.constant 0 : index
    %c0_56 = arith.constant 0 : index
    %c0_57 = arith.constant 0 : index
    %c48 = arith.constant 48 : index
    %94 = vector.load %arg5[%c0_55, %c0_56, %c0_57, %c48] : memref<1x1x8x128xf32, #tpu.memory_space<vmem>>, vector<1x1x8x16xf32>
    %95 = vector.shape_cast %94 : vector<1x1x8x16xf32> to vector<8x16xf32>
    %96 = vector.shape_cast %93 : vector<8x16xf32> to vector<1x1x8x16xf32>
    tpu.vector_store %arg5[%c0_55, %c0_56, %c0_57, %c48], %96 {strides = array<i32>} : memref<1x1x8x128xf32, #tpu.memory_space<vmem>>, vector<1x1x8x16xf32>,
    %c8_i32_58 = arith.constant 8 : i32
    %97 = arith.muli %arg1, %c8_i32_58 : i32
    %c4_i32 = arith.constant 4 : i32
    %98 = arith.addi %97, %c4_i32 : i32
    %c15_i32_59 = arith.constant 15 : i32
    %99 = arith.minsi %98, %c15_i32_59 : i32
    %c8_i32_60 = arith.constant 8 : i32
    %100 = arith.muli %99, %c8_i32_60 : i32
    %101 = tpu.assume_multiple %100, 8 : i32
    %c0_61 = arith.constant 0 : index
    %c0_62 = arith.constant 0 : index
    %102 = arith.index_cast %101 : i32 to index
    %c0_63 = arith.constant 0 : index
    %103 = vector.load %arg2[%c0_61, %c0_62, %102, %c0_63] : memref<1x1x144x18xbf16, #tpu.memory_space<vmem>>, vector<1x1x24x18xbf16>
    %104 = vector.shape_cast %103 : vector<1x1x24x18xbf16> to vector<24x18xbf16>
    %105 = vector.extract_strided_slice %104 {offsets = [0, 0], sizes = [24, 16], strides = [1, 1]} : vector<24x18xbf16> to vector<24x16xbf16>
    %cst_64 = arith.constant dense<0.000000e+00> : vector<8x16xf32>
    %106 = tpu.matmul %1, %105, %cst_64 {dimension_numbers = #tpu.dot_dimension_numbers<[1], [0], [0], [1], [0, 0, 1, 1], [], []>} : vector<8x24xbf16>, vector<24x16xbf16>, vector<8x16xf32> -> vector<8x16xf32>
    %107 = arith.addf %8, %106 : vector<8x16xf32>
    %108 = vector.extract_strided_slice %104 {offsets = [0, 1], sizes = [24, 16], strides = [1, 1]} : vector<24x18xbf16> to vector<24x16xbf16>
    %cst_65 = arith.constant dense<0.000000e+00> : vector<8x16xf32>
    %109 = tpu.matmul %3, %108, %cst_65 {dimension_numbers = #tpu.dot_dimension_numbers<[1], [0], [0], [1], [0, 0, 1, 1], [], []>} : vector<8x24xbf16>, vector<24x16xbf16>, vector<8x16xf32> -> vector<8x16xf32>
    %110 = arith.addf %107, %109 : vector<8x16xf32>
    %111 = vector.extract_strided_slice %104 {offsets = [0, 2], sizes = [24, 16], strides = [1, 1]} : vector<24x18xbf16> to vector<24x16xbf16>
    %cst_66 = arith.constant dense<0.000000e+00> : vector<8x16xf32>
    %112 = tpu.matmul %5, %111, %cst_66 {dimension_numbers = #tpu.dot_dimension_numbers<[1], [0], [0], [1], [0, 0, 1, 1], [], []>} : vector<8x24xbf16>, vector<24x16xbf16>, vector<8x16xf32> -> vector<8x16xf32>
    %113 = arith.addf %110, %112 : vector<8x16xf32>
    %cst_67 = arith.constant 0.000000e+00 : f32
    %114 = vector.broadcast %cst_67 : f32 to vector<8x16xf32>
    %115 = arith.maximumf %113, %114 : vector<8x16xf32>
    %c0_68 = arith.constant 0 : index
    %c0_69 = arith.constant 0 : index
    %c0_70 = arith.constant 0 : index
    %c64 = arith.constant 64 : index
    %116 = vector.load %arg5[%c0_68, %c0_69, %c0_70, %c64] : memref<1x1x8x128xf32, #tpu.memory_space<vmem>>, vector<1x1x8x16xf32>
    %117 = vector.shape_cast %116 : vector<1x1x8x16xf32> to vector<8x16xf32>
    %118 = vector.shape_cast %115 : vector<8x16xf32> to vector<1x1x8x16xf32>
    tpu.vector_store %arg5[%c0_68, %c0_69, %c0_70, %c64], %118 {strides = array<i32>} : memref<1x1x8x128xf32, #tpu.memory_space<vmem>>, vector<1x1x8x16xf32>,
    %c8_i32_71 = arith.constant 8 : i32
    %119 = arith.muli %arg1, %c8_i32_71 : i32
    %c5_i32 = arith.constant 5 : i32
    %120 = arith.addi %119, %c5_i32 : i32
    %c15_i32_72 = arith.constant 15 : i32
    %121 = arith.minsi %120, %c15_i32_72 : i32
    %c8_i32_73 = arith.constant 8 : i32
    %122 = arith.muli %121, %c8_i32_73 : i32
    %123 = tpu.assume_multiple %122, 8 : i32
    %c0_74 = arith.constant 0 : index
    %c0_75 = arith.constant 0 : index
    %124 = arith.index_cast %123 : i32 to index
    %c0_76 = arith.constant 0 : index
    %125 = vector.load %arg2[%c0_74, %c0_75, %124, %c0_76] : memref<1x1x144x18xbf16, #tpu.memory_space<vmem>>, vector<1x1x24x18xbf16>
    %126 = vector.shape_cast %125 : vector<1x1x24x18xbf16> to vector<24x18xbf16>
    %127 = vector.extract_strided_slice %126 {offsets = [0, 0], sizes = [24, 16], strides = [1, 1]} : vector<24x18xbf16> to vector<24x16xbf16>
    %cst_77 = arith.constant dense<0.000000e+00> : vector<8x16xf32>
    %128 = tpu.matmul %1, %127, %cst_77 {dimension_numbers = #tpu.dot_dimension_numbers<[1], [0], [0], [1], [0, 0, 1, 1], [], []>} : vector<8x24xbf16>, vector<24x16xbf16>, vector<8x16xf32> -> vector<8x16xf32>
    %129 = arith.addf %8, %128 : vector<8x16xf32>
    %130 = vector.extract_strided_slice %126 {offsets = [0, 1], sizes = [24, 16], strides = [1, 1]} : vector<24x18xbf16> to vector<24x16xbf16>
    %cst_78 = arith.constant dense<0.000000e+00> : vector<8x16xf32>
    %131 = tpu.matmul %3, %130, %cst_78 {dimension_numbers = #tpu.dot_dimension_numbers<[1], [0], [0], [1], [0, 0, 1, 1], [], []>} : vector<8x24xbf16>, vector<24x16xbf16>, vector<8x16xf32> -> vector<8x16xf32>
    %132 = arith.addf %129, %131 : vector<8x16xf32>
    %133 = vector.extract_strided_slice %126 {offsets = [0, 2], sizes = [24, 16], strides = [1, 1]} : vector<24x18xbf16> to vector<24x16xbf16>
    %cst_79 = arith.constant dense<0.000000e+00> : vector<8x16xf32>
    %134 = tpu.matmul %5, %133, %cst_79 {dimension_numbers = #tpu.dot_dimension_numbers<[1], [0], [0], [1], [0, 0, 1, 1], [], []>} : vector<8x24xbf16>, vector<24x16xbf16>, vector<8x16xf32> -> vector<8x16xf32>
    %135 = arith.addf %132, %134 : vector<8x16xf32>
    %cst_80 = arith.constant 0.000000e+00 : f32
    %136 = vector.broadcast %cst_80 : f32 to vector<8x16xf32>
    %137 = arith.maximumf %135, %136 : vector<8x16xf32>
    %c0_81 = arith.constant 0 : index
    %c0_82 = arith.constant 0 : index
    %c0_83 = arith.constant 0 : index
    %c80 = arith.constant 80 : index
    %138 = vector.load %arg5[%c0_81, %c0_82, %c0_83, %c80] : memref<1x1x8x128xf32, #tpu.memory_space<vmem>>, vector<1x1x8x16xf32>
    %139 = vector.shape_cast %138 : vector<1x1x8x16xf32> to vector<8x16xf32>
    %140 = vector.shape_cast %137 : vector<8x16xf32> to vector<1x1x8x16xf32>
    tpu.vector_store %arg5[%c0_81, %c0_82, %c0_83, %c80], %140 {strides = array<i32>} : memref<1x1x8x128xf32, #tpu.memory_space<vmem>>, vector<1x1x8x16xf32>,
    %c8_i32_84 = arith.constant 8 : i32
    %141 = arith.muli %arg1, %c8_i32_84 : i32
    %c6_i32 = arith.constant 6 : i32
    %142 = arith.addi %141, %c6_i32 : i32
    %c15_i32_85 = arith.constant 15 : i32
    %143 = arith.minsi %142, %c15_i32_85 : i32
    %c8_i32_86 = arith.constant 8 : i32
    %144 = arith.muli %143, %c8_i32_86 : i32
    %145 = tpu.assume_multiple %144, 8 : i32
    %c0_87 = arith.constant 0 : index
    %c0_88 = arith.constant 0 : index
    %146 = arith.index_cast %145 : i32 to index
    %c0_89 = arith.constant 0 : index
    %147 = vector.load %arg2[%c0_87, %c0_88, %146, %c0_89] : memref<1x1x144x18xbf16, #tpu.memory_space<vmem>>, vector<1x1x24x18xbf16>
    %148 = vector.shape_cast %147 : vector<1x1x24x18xbf16> to vector<24x18xbf16>
    %149 = vector.extract_strided_slice %148 {offsets = [0, 0], sizes = [24, 16], strides = [1, 1]} : vector<24x18xbf16> to vector<24x16xbf16>
    %cst_90 = arith.constant dense<0.000000e+00> : vector<8x16xf32>
    %150 = tpu.matmul %1, %149, %cst_90 {dimension_numbers = #tpu.dot_dimension_numbers<[1], [0], [0], [1], [0, 0, 1, 1], [], []>} : vector<8x24xbf16>, vector<24x16xbf16>, vector<8x16xf32> -> vector<8x16xf32>
    %151 = arith.addf %8, %150 : vector<8x16xf32>
    %152 = vector.extract_strided_slice %148 {offsets = [0, 1], sizes = [24, 16], strides = [1, 1]} : vector<24x18xbf16> to vector<24x16xbf16>
    %cst_91 = arith.constant dense<0.000000e+00> : vector<8x16xf32>
    %153 = tpu.matmul %3, %152, %cst_91 {dimension_numbers = #tpu.dot_dimension_numbers<[1], [0], [0], [1], [0, 0, 1, 1], [], []>} : vector<8x24xbf16>, vector<24x16xbf16>, vector<8x16xf32> -> vector<8x16xf32>
    %154 = arith.addf %151, %153 : vector<8x16xf32>
    %155 = vector.extract_strided_slice %148 {offsets = [0, 2], sizes = [24, 16], strides = [1, 1]} : vector<24x18xbf16> to vector<24x16xbf16>
    %cst_92 = arith.constant dense<0.000000e+00> : vector<8x16xf32>
    %156 = tpu.matmul %5, %155, %cst_92 {dimension_numbers = #tpu.dot_dimension_numbers<[1], [0], [0], [1], [0, 0, 1, 1], [], []>} : vector<8x24xbf16>, vector<24x16xbf16>, vector<8x16xf32> -> vector<8x16xf32>
    %157 = arith.addf %154, %156 : vector<8x16xf32>
    %cst_93 = arith.constant 0.000000e+00 : f32
    %158 = vector.broadcast %cst_93 : f32 to vector<8x16xf32>
    %159 = arith.maximumf %157, %158 : vector<8x16xf32>
    %c0_94 = arith.constant 0 : index
    %c0_95 = arith.constant 0 : index
    %c0_96 = arith.constant 0 : index
    %c96 = arith.constant 96 : index
    %160 = vector.load %arg5[%c0_94, %c0_95, %c0_96, %c96] : memref<1x1x8x128xf32, #tpu.memory_space<vmem>>, vector<1x1x8x16xf32>
    %161 = vector.shape_cast %160 : vector<1x1x8x16xf32> to vector<8x16xf32>
    %162 = vector.shape_cast %159 : vector<8x16xf32> to vector<1x1x8x16xf32>
    tpu.vector_store %arg5[%c0_94, %c0_95, %c0_96, %c96], %162 {strides = array<i32>} : memref<1x1x8x128xf32, #tpu.memory_space<vmem>>, vector<1x1x8x16xf32>,
    %c8_i32_97 = arith.constant 8 : i32
    %163 = arith.muli %arg1, %c8_i32_97 : i32
    %c7_i32 = arith.constant 7 : i32
    %164 = arith.addi %163, %c7_i32 : i32
    %c15_i32_98 = arith.constant 15 : i32
    %165 = arith.minsi %164, %c15_i32_98 : i32
    %c8_i32_99 = arith.constant 8 : i32
    %166 = arith.muli %165, %c8_i32_99 : i32
    %167 = tpu.assume_multiple %166, 8 : i32
    %c0_100 = arith.constant 0 : index
    %c0_101 = arith.constant 0 : index
    %168 = arith.index_cast %167 : i32 to index
    %c0_102 = arith.constant 0 : index
    %169 = vector.load %arg2[%c0_100, %c0_101, %168, %c0_102] : memref<1x1x144x18xbf16, #tpu.memory_space<vmem>>, vector<1x1x24x18xbf16>
    %170 = vector.shape_cast %169 : vector<1x1x24x18xbf16> to vector<24x18xbf16>
    %171 = vector.extract_strided_slice %170 {offsets = [0, 0], sizes = [24, 16], strides = [1, 1]} : vector<24x18xbf16> to vector<24x16xbf16>
    %cst_103 = arith.constant dense<0.000000e+00> : vector<8x16xf32>
    %172 = tpu.matmul %1, %171, %cst_103 {dimension_numbers = #tpu.dot_dimension_numbers<[1], [0], [0], [1], [0, 0, 1, 1], [], []>} : vector<8x24xbf16>, vector<24x16xbf16>, vector<8x16xf32> -> vector<8x16xf32>
    %173 = arith.addf %8, %172 : vector<8x16xf32>
    %174 = vector.extract_strided_slice %170 {offsets = [0, 1], sizes = [24, 16], strides = [1, 1]} : vector<24x18xbf16> to vector<24x16xbf16>
    %cst_104 = arith.constant dense<0.000000e+00> : vector<8x16xf32>
    %175 = tpu.matmul %3, %174, %cst_104 {dimension_numbers = #tpu.dot_dimension_numbers<[1], [0], [0], [1], [0, 0, 1, 1], [], []>} : vector<8x24xbf16>, vector<24x16xbf16>, vector<8x16xf32> -> vector<8x16xf32>
    %176 = arith.addf %173, %175 : vector<8x16xf32>
    %177 = vector.extract_strided_slice %170 {offsets = [0, 2], sizes = [24, 16], strides = [1, 1]} : vector<24x18xbf16> to vector<24x16xbf16>
    %cst_105 = arith.constant dense<0.000000e+00> : vector<8x16xf32>
    %178 = tpu.matmul %5, %177, %cst_105 {dimension_numbers = #tpu.dot_dimension_numbers<[1], [0], [0], [1], [0, 0, 1, 1], [], []>} : vector<8x24xbf16>, vector<24x16xbf16>, vector<8x16xf32> -> vector<8x16xf32>
    %179 = arith.addf %176, %178 : vector<8x16xf32>
    %cst_106 = arith.constant 0.000000e+00 : f32
    %180 = vector.broadcast %cst_106 : f32 to vector<8x16xf32>
    %181 = arith.maximumf %179, %180 : vector<8x16xf32>
    %c0_107 = arith.constant 0 : index
    %c0_108 = arith.constant 0 : index
    %c0_109 = arith.constant 0 : index
    %c112 = arith.constant 112 : index
    %182 = vector.load %arg5[%c0_107, %c0_108, %c0_109, %c112] : memref<1x1x8x128xf32, #tpu.memory_space<vmem>>, vector<1x1x8x16xf32>
    %183 = vector.shape_cast %182 : vector<1x1x8x16xf32> to vector<8x16xf32>
    %184 = vector.shape_cast %181 : vector<8x16xf32> to vector<1x1x8x16xf32>
    tpu.vector_store %arg5[%c0_107, %c0_108, %c0_109, %c112], %184 {strides = array<i32>} : memref<1x1x8x128xf32, #tpu.memory_space<vmem>>, vector<1x1x8x16xf32>,
    return
  }
  func.func @transform_0(%arg0: i32, %arg1: i32) -> (i32, i32, i32, i32) {
    %c0_i32 = arith.constant 0 : i32
    %c0_i32_0 = arith.constant 0 : i32
    %c0_i32_1 = arith.constant 0 : i32
    %c0_i32_2 = arith.constant 0 : i32
    return %arg0, %c0_i32, %c0_i32_0, %c0_i32_1 : i32, i32, i32, i32
  }
  func.func @transform_1(%arg0: i32, %arg1: i32) -> (i32, i32, i32) {
    %c0_i32 = arith.constant 0 : i32
    %c0_i32_0 = arith.constant 0 : i32
    %c0_i32_1 = arith.constant 0 : i32
    %c0_i32_2 = arith.constant 0 : i32
    return %c0_i32, %c0_i32_0, %c0_i32_1 : i32, i32, i32
  }
  func.func @transform_2(%arg0: i32, %arg1: i32) -> (i32, i32) {
    %c0_i32 = arith.constant 0 : i32
    %c0_i32_0 = arith.constant 0 : i32
    %c0_i32_1 = arith.constant 0 : i32
    return %c0_i32, %c0_i32_0 : i32, i32
  }
  func.func @transform_3(%arg0: i32, %arg1: i32) -> (i32, i32, i32, i32) {
    %c0_i32 = arith.constant 0 : i32
    %c0_i32_0 = arith.constant 0 : i32
    %c0_i32_1 = arith.constant 0 : i32
    return %arg0, %arg1, %c0_i32, %c0_i32_0 : i32, i32, i32, i32
  }
}

</mosaic_0001>

<llo_original>
// kernel: tpu_custom_call.1
$region0: #{tpu_custom_call.1}
  #allocation0 [shape = 'u32[]', space=smem, size = 0x4, offset = 0x4, fixed_abs, tag = 'smem constant byte address 0x4 - core index']
  #allocation1 [shape = 'u32[72,128]{1,0:T(1,128)}', space=vmem, size = 0x9000, scoped, tag = 'internal scratch']
  %s0 = inlined_call_operand.vmem [shape: bf16[2,1,144,18], index: 0, kind: input, shape index: {}]
  %s1 = inlined_call_operand.vmem [shape: bf16[3,8,24], index: 1, kind: input, shape index: {}]
  %s2 = inlined_call_operand.vmem [shape: f32[8,1], index: 2, kind: input, shape index: {}]
  %s3 = inlined_call_operand.hbm [shape: f32[2,2,8,128], index: 3, kind: output, shape index: {}]
  %s4 = sld [smem:[#allocation0]]
  $region45: #{tpu_custom_call.1} parent=0
    _
  %s6 = ssub.s32 1, %s4
  %s7 = scalar_select 0, %s6, %s4
  $region1: #{tpu_custom_call.1} parent=0
    #allocation2 [shape = 'u8[8192]{0}', space=vmem, size = 0x2000, scoped, tag = 'output window, operand 0']
    #allocation3 [shape = 's32[2]{0}', space=sflag, size = 0x8, scoped, tag = 'scoped memory for tpu_custom_call.1']
    %8 = vsyncpa [#allocation3], 0
    %s9 = scalar_lea.sflag [#allocation3], 1
    %10 = vsyncpa %s9, 0
    loop: start=0, step=1, limit=6
    $region2: #{tpu_custom_call.1} parent=1 // loop_pre_header
      _
    $region3: #{tpu_custom_call.1} parent=1 // loop_header
      %s12 = sphi 0, %s16
      %p13 = scmp.ge.s32.totalorder %s12, 6
      %s19 = sphi 0, %s31
      %s20 = sphi 0, %s27
      %s21 = sphi 0, %s19
      %s22 = sphi 0, %s20
      %s23 = sphi 0, %s21
      %s24 = sphi 0, %s22
      %s34 = sphi 0, %s36
      %s37 = sphi 0, %s34
      %s38 = sphi 0, %s37
      %s54 = sphi 0, %s38
      %s58 = sphi 0, %s58
      %s60 = sphi 0, %s58
      %s61 = sphi 0, %s60
      %s75 = sphi 0, %s61
      %s79 = sphi 0, %s79
      %s81 = sphi 0, %s79
      %s82 = sphi 0, %s81
      %s96 = sphi 0, %s82
      %s104 = sphi 0, %s106
      %s107 = sphi 0, %s104
      %s108 = sphi 0, %s107
      %s124 = sphi 0, %s108
    $region4: #{tpu_custom_call.1} parent=1 // loop_header_branch
      %15 = sbr.rel (%p13) target = $region8
    $region5: #{tpu_custom_call.1} parent=1 // loop_body
      %s17 = ssub.s32 %s12, 1
      %s18 = ssub.s32 %s12, 2
      %s25 = sadd.s32 1, %s20
      %p26 = scmp.ge.s32.totalorder %s25, 2
      %s27 = scalar_select %p26, 0, %s25
      %s28 = sadd.s32 1, %s19
      %s29 = scalar_select %p26, %s28, %s19
      %p30 = scmp.ge.s32.totalorder %s29, 2
      %s31 = scalar_select %p30, 0, %s29
      %s32 = ssub.s32 %s19, %s31
      %p33 = scmp.eq.s32.totalorder %s32, 0
      %s35 = sadd.s32 %s34, 1
      %s36 = scalar_select %p33, %s34, %s35
      %p39 = pneg %p33
      %p40 = scmp.eq.s32.totalorder %s12, 3
      %p41 = por %p39, %p40
      %p42 = scmp.ne.s32.totalorder %s34, %s37
      %p43 = scmp.eq.s32.totalorder %s12, 0
      %p44 = por %p42, %p43
      %p45 = scmp.ne.s32.totalorder %s34, %s37
      %p46 = scmp.eq.s32.totalorder %s17, 3
      %p47 = por %p45, %p46
      %p48 = scmp.ne.s32.totalorder %s37, %s38
      %p49 = scmp.eq.s32.totalorder %s17, 0
      %p50 = por %p48, %p49
      %p51 = scmp.ne.s32.totalorder %s37, %s38
      %p52 = scmp.eq.s32.totalorder %s18, 3
      %p53 = por %p51, %p52
      %p55 = scmp.ne.s32.totalorder %s38, %s54
      %p56 = scmp.eq.s32.totalorder %s18, 0
      %p57 = por %p55, %p56
      %s59 = sadd.s32 %s58, 1
      %p62 = scmp.eq.s32.totalorder %s12, 3
      %p63 = scmp.ne.s32.totalorder %s58, %s60
      %p64 = scmp.eq.s32.totalorder %s12, 0
      %p65 = por %p63, %p64
      %p66 = scmp.ne.s32.totalorder %s58, %s60
      %p67 = scmp.eq.s32.totalorder %s17, 3
      %p68 = por %p66, %p67
      %p69 = scmp.ne.s32.totalorder %s60, %s61
      %p70 = scmp.eq.s32.totalorder %s17, 0
      %p71 = por %p69, %p70
      %p72 = scmp.ne.s32.totalorder %s60, %s61
      %p73 = scmp.eq.s32.totalorder %s18, 3
      %p74 = por %p72, %p73
      %p76 = scmp.ne.s32.totalorder %s61, %s75
      %p77 = scmp.eq.s32.totalorder %s18, 0
      %p78 = por %p76, %p77
      %s80 = sadd.s32 %s79, 1
      %p83 = scmp.eq.s32.totalorder %s12, 3
      %p84 = scmp.ne.s32.totalorder %s79, %s81
      %p85 = scmp.eq.s32.totalorder %s12, 0
      %p86 = por %p84, %p85
      %p87 = scmp.ne.s32.totalorder %s79, %s81
      %p88 = scmp.eq.s32.totalorder %s17, 3
      %p89 = por %p87, %p88
      %p90 = scmp.ne.s32.totalorder %s81, %s82
      %p91 = scmp.eq.s32.totalorder %s17, 0
      %p92 = por %p90, %p91
      %p93 = scmp.ne.s32.totalorder %s81, %s82
      %p94 = scmp.eq.s32.totalorder %s18, 3
      %p95 = por %p93, %p94
      %p97 = scmp.ne.s32.totalorder %s82, %s96
      %p98 = scmp.eq.s32.totalorder %s18, 0
      %p99 = por %p97, %p98
      %s100 = ssub.s32 %s19, %s31
      %s101 = ssub.s32 %s20, %s27
      %s102 = sor.u32 %s100, %s101
      %p103 = scmp.eq.s32.totalorder %s102, 0
      %s105 = sadd.s32 %s104, 1
      %s106 = scalar_select %p103, %s104, %s105
      %p109 = pneg %p103
      %p110 = scmp.eq.s32.totalorder %s12, 3
      %p111 = por %p109, %p110
      %p112 = scmp.ne.s32.totalorder %s104, %s107
      %p113 = scmp.eq.s32.totalorder %s12, 0
      %p114 = por %p112, %p113
      %p115 = scmp.ne.s32.totalorder %s104, %s107
      %p116 = scmp.eq.s32.totalorder %s17, 3
      %p117 = por %p115, %p116
      %p118 = scmp.ne.s32.totalorder %s107, %s108
      %p119 = scmp.eq.s32.totalorder %s17, 0
      %p120 = por %p118, %p119
      %p121 = scmp.ne.s32.totalorder %s107, %s108
      %p122 = scmp.eq.s32.totalorder %s18, 3
      %p123 = por %p121, %p122
      %p125 = scmp.ne.s32.totalorder %s108, %s124
      %p126 = scmp.eq.s32.totalorder %s18, 0
      %p127 = por %p125, %p126
      %p128 = scmp.le.s32.totalorder 1, %s12
      %p129 = scmp.lt.s32.totalorder %s12, 5
      %p130 = pnand %p128, %p129
      %p131 = pneg %p130
      // Predicated region
      $region9: #{tpu_custom_call.1} parent=5 // pred_check
        _
      $region10: #{tpu_custom_call.1} parent=5 // pred_check_branch
        %133 = sbr.rel (%p130) target = $region12
      $region11: #{tpu_custom_call.1} parent=5 // pred_region
        %s134 = ssub.s32 %s12, 1
        // Predicated region
        $region13: #{tpu_custom_call.1} parent=11 // pred_check
          %p135 = pneg %p71
        $region14: #{tpu_custom_call.1} parent=11 // pred_check_branch
          %137 = sbr.rel (%p135) target = $region16
        $region15: #{tpu_custom_call.1} parent=11 // pred_region
          _
        $region16: #{tpu_custom_call.1} parent=11 // pred_fallthru
          _
        // Predicated region
        $region17: #{tpu_custom_call.1} parent=11 // pred_check
          %p138 = pneg %p92
        $region18: #{tpu_custom_call.1} parent=11 // pred_check_branch
          %140 = sbr.rel (%p138) target = $region20
        $region19: #{tpu_custom_call.1} parent=11 // pred_region
          _
        $region20: #{tpu_custom_call.1} parent=11 // pred_fallthru
          _
      $region12: #{tpu_custom_call.1} parent=5 // pred_fallthru
        _
      %p141 = scmp.lt.s32.totalorder %s12, 4
      // Predicated region
      $region21: #{tpu_custom_call.1} parent=5 // pred_check
        %p142 = pneg %p141
      $region22: #{tpu_custom_call.1} parent=5 // pred_check_branch
        %144 = sbr.rel (%p142) target = $region24
      $region23: #{tpu_custom_call.1} parent=5 // pred_region
        // Predicated region
        $region25: #{tpu_custom_call.1} parent=23 // pred_check
          %p145 = pneg %p44
        $region26: #{tpu_custom_call.1} parent=23 // pred_check_branch
          %147 = sbr.rel (%p145) target = $region28
        $region27: #{tpu_custom_call.1} parent=23 // pred_region
          %p148 = scmp.lt.s32.totalorder %s19, 1
          %s149 = scalar_select %p148, %s19, 1
          %s150 = smul.addr %s149, 18
          %s151 = smul.addr %s150, 4
          %s152 = scalar_lea.vmem %s0, %s151
        $region28: #{tpu_custom_call.1} parent=23 // pred_fallthru
          _
      $region24: #{tpu_custom_call.1} parent=5 // pred_fallthru
        _
      %p153 = scmp.le.s32.totalorder 1, %s12
      %p154 = scmp.lt.s32.totalorder %s12, 5
      %p155 = pnand %p153, %p154
      %p156 = pneg %p155
      // Predicated region
      $region29: #{tpu_custom_call.1} parent=5 // pred_check
        _
      $region30: #{tpu_custom_call.1} parent=5 // pred_check_branch
        %158 = sbr.rel (%p155) target = $region32
      $region31: #{tpu_custom_call.1} parent=5 // pred_region
        %s159 = ssub.s32 %s12, 1
        %p160 = scmp.lt.s32.totalorder %s21, 1
        %s161 = scalar_select %p160, %s21, 1
        %s162 = smul.addr %s161, 18
        %s163 = smul.addr %s162, 4
        %s164 = scalar_lea.vmem %s0, %s163
        %p165 = pneg %p50
        %p166 = pneg %p47
        %p167 = pneg %p71
        %p168 = pneg %p68
        %p169 = pneg %p92
        %p170 = pneg %p89
        %p171 = pneg %p120
        %p172 = pneg %p117
        %s173 = sand.u32 %s107, 1
        %s174 = scalar_lea.sflag [#allocation3], %s173
        %s175 = sand.u32 %s107, 1
        %s176 = smul.addr %s175, 8
        %s177 = scalar_lea.vmem [#allocation2], %s176
        %p178 = scmp.lt.s32.totalorder %s21, 1
        %s179 = scalar_select %p178, %s21, 1
        %s180 = smul.addr %s179, 18
        %s181 = smul.addr %s180, 4
        %s182 = scalar_lea.vmem %s0, %s181
        %v184 = vld [vmem:[%s1] sm:$0xf]
        %s185 = scalar_lea.vmem %s1, 4
        %v186 = vld [vmem:[%s185] sm:$0xf]
        %s187 = scalar_lea.vmem %s1, 8
        %v188 = vld [vmem:[%s187] sm:$0xf]
        %v189 = vld [vmem:[%s2] sm:$0xff]
        %191 = vset.pattern.permute.xlu0 0
        %192 = vperm.xlu0 %191, %v189
        %v193 = vpop.permute.xlu0 %192
        %s195 = smul.u32 %s22, 8
        %p196 = scmp.lt.s32.totalorder %s195, 15
        %s197 = scalar_select %p196, %s195, 15
        %s198 = smul.u32 %s197, 8
        %s199 = sshra.s32 %s198, 3
        %s200 = sand.u32 %s198, 7
        %s201 = smul.addr %s199, 4
        %s202 = scalar_lea.vmem %s182, %s201
        %v203 = vld [vmem:[%s202] sm:$0xf]
        %v204 = vld [vmem:[%s202 + $0x4] sm:$0xf]
        %v205 = vld [vmem:[%s202 + $0x8] sm:$0xf]
        %v209 = vunpack.c.l.b16 %v203
        %v210 = vunpack.c.l.b16 %v204
        %v211 = vunpack.c.l.b16 %v205
        %v212 = vpack.c.b16 %v210, %v209
        %v213 = vpack.c.b16 %v211, %v211
        %vm215 = vcmask 195584
        %v217 = vsel %vm215, %v184, 0
        %vm219 = vcmask 1043456
        %v221 = vsel %vm219, %v213, 0
        %223 = vmatpush.bf16.msra.mxu0 0
        %224 = vmatpush.bf16.msra.mxu0 0
        %225 = vmatpush.bf16.msra.mxu0 0
        %226 = vmatpush.bf16.msra.mxu0 0
        %227 = vmatpush.bf16.msra.mxu0 0
        %228 = vmatpush.bf16.msra.mxu0 0
        %229 = vmatpush.bf16.msra.mxu0 %v221
        %230 = vmatpush.bf16.msra.mxu0 %v212
        %231 = vmatmul.bf16.gmra.mxu0 %v217
        %v232 = vpop.f32.mrf.mxu0
        %v233 = vadd.f32 0.0, %v232
        %v234 = vpop.f32.mrf.mxu0
        %235 = vdwg.mxu0
        %v236 = vadd.f32 %v193, %v233
        %237 = vrot.lane.b32.xlu0 %v212, 127
        %v238 = vpop.permute.xlu0 %237
        %239 = vrot.lane.b32.xlu0 %v213, 127
        %v240 = vpop.permute.xlu0 %239
        %v243 = vsel %vm215, %v186, 0
        %v246 = vsel %vm219, %v240, 0
        %248 = vmatpush.bf16.msra.mxu0 0
        %249 = vmatpush.bf16.msra.mxu0 0
        %250 = vmatpush.bf16.msra.mxu0 0
        %251 = vmatpush.bf16.msra.mxu0 0
        %252 = vmatpush.bf16.msra.mxu0 0
        %253 = vmatpush.bf16.msra.mxu0 0
        %254 = vmatpush.bf16.msra.mxu0 %v246
        %255 = vmatpush.bf16.msra.mxu0 %v238
        %256 = vmatmul.bf16.gmra.mxu0 %v243
        %v257 = vpop.f32.mrf.mxu0
        %v258 = vadd.f32 0.0, %v257
        %v259 = vpop.f32.mrf.mxu0
        %260 = vdwg.mxu0
        %v261 = vadd.f32 %v236, %v258
        %262 = vrot.lane.b32.xlu0 %v212, 126
        %v263 = vpop.permute.xlu0 %262
        %264 = vrot.lane.b32.xlu0 %v213, 126
        %v265 = vpop.permute.xlu0 %264
        %v268 = vsel %vm215, %v188, 0
        %v271 = vsel %vm219, %v265, 0
        %273 = vmatpush.bf16.msra.mxu0 0
        %274 = vmatpush.bf16.msra.mxu0 0
        %275 = vmatpush.bf16.msra.mxu0 0
        %276 = vmatpush.bf16.msra.mxu0 0
        %277 = vmatpush.bf16.msra.mxu0 0
        %278 = vmatpush.bf16.msra.mxu0 0
        %279 = vmatpush.bf16.msra.mxu0 %v271
        %280 = vmatpush.bf16.msra.mxu0 %v263
        %281 = vmatmul.bf16.gmra.mxu0 %v268
        %v282 = vpop.f32.mrf.mxu0
        %v283 = vadd.f32 0.0, %v282
        %v284 = vpop.f32.mrf.mxu0
        %285 = vdwg.mxu0
        %v286 = vadd.f32 %v261, %v283
        %v287 = vmax.f32 %v286, 0.0
        %vm288 = vcmask 130048
        %289 = vst.msk [vmem:[%s177] sm:$0xff] %vm288, %v287
        %s290 = sadd.s32 %s195, 1
        %p291 = scmp.lt.s32.totalorder %s290, 15
        %s292 = scalar_select %p291, %s290, 15
        %s293 = smul.u32 %s292, 8
        %s294 = sshra.s32 %s293, 3
        %s295 = sand.u32 %s293, 7
        %s296 = smul.addr %s294, 4
        %s297 = scalar_lea.vmem %s182, %s296
        %v298 = vld [vmem:[%s297] sm:$0xf]
        %v299 = vld [vmem:[%s297 + $0x4] sm:$0xf]
        %v300 = vld [vmem:[%s297 + $0x8] sm:$0xf]
        %v304 = vunpack.c.l.b16 %v298
        %v305 = vunpack.c.l.b16 %v299
        %v306 = vunpack.c.l.b16 %v300
        %v307 = vpack.c.b16 %v305, %v304
        %v308 = vpack.c.b16 %v306, %v306
        %v311 = vsel %vm219, %v308, 0
        %313 = vmatpush.bf16.msra.mxu0 0
        %314 = vmatpush.bf16.msra.mxu0 0
        %315 = vmatpush.bf16.msra.mxu0 0
        %316 = vmatpush.bf16.msra.mxu0 0
        %317 = vmatpush.bf16.msra.mxu0 0
        %318 = vmatpush.bf16.msra.mxu0 0
        %319 = vmatpush.bf16.msra.mxu0 %v311
        %320 = vmatpush.bf16.msra.mxu0 %v307
        %321 = vmatmul.bf16.gmra.mxu0 %v217
        %v322 = vpop.f32.mrf.mxu0
        %v323 = vadd.f32 0.0, %v322
        %v324 = vpop.f32.mrf.mxu0
        %325 = vdwg.mxu0
        %v326 = vadd.f32 %v193, %v323
        %327 = vrot.lane.b32.xlu0 %v307, 127
        %v328 = vpop.permute.xlu0 %327
        %329 = vrot.lane.b32.xlu0 %v308, 127
        %v330 = vpop.permute.xlu0 %329
        %v333 = vsel %vm219, %v330, 0
        %335 = vmatpush.bf16.msra.mxu0 0
        %336 = vmatpush.bf16.msra.mxu0 0
        %337 = vmatpush.bf16.msra.mxu0 0
        %338 = vmatpush.bf16.msra.mxu0 0
        %339 = vmatpush.bf16.msra.mxu0 0
        %340 = vmatpush.bf16.msra.mxu0 0
        %341 = vmatpush.bf16.msra.mxu0 %v333
        %342 = vmatpush.bf16.msra.mxu0 %v328
        %343 = vmatmul.bf16.gmra.mxu0 %v243
        %v344 = vpop.f32.mrf.mxu0
        %v345 = vadd.f32 0.0, %v344
        %v346 = vpop.f32.mrf.mxu0
        %347 = vdwg.mxu0
        %v348 = vadd.f32 %v326, %v345
        %349 = vrot.lane.b32.xlu0 %v307, 126
        %v350 = vpop.permute.xlu0 %349
        %351 = vrot.lane.b32.xlu0 %v308, 126
        %v352 = vpop.permute.xlu0 %351
        %v355 = vsel %vm219, %v352, 0
        %357 = vmatpush.bf16.msra.mxu0 0
        %358 = vmatpush.bf16.msra.mxu0 0
        %359 = vmatpush.bf16.msra.mxu0 0
        %360 = vmatpush.bf16.msra.mxu0 0
        %361 = vmatpush.bf16.msra.mxu0 0
        %362 = vmatpush.bf16.msra.mxu0 0
        %363 = vmatpush.bf16.msra.mxu0 %v355
        %364 = vmatpush.bf16.msra.mxu0 %v350
        %365 = vmatmul.bf16.gmra.mxu0 %v268
        %v366 = vpop.f32.mrf.mxu0
        %v367 = vadd.f32 0.0, %v366
        %v368 = vpop.f32.mrf.mxu0
        %369 = vdwg.mxu0
        %v370 = vadd.f32 %v348, %v367
        %v371 = vmax.f32 %v370, 0.0
        %373 = vrot.lane.b32.xlu0 %v371, 16
        %v374 = vpop.permute.xlu0 %373
        %vm376 = vcmask 261248
        %377 = vst.msk [vmem:[%s177] sm:$0xff] %vm376, %v374
        %s378 = sadd.s32 %s195, 2
        %p379 = scmp.lt.s32.totalorder %s378, 15
        %s380 = scalar_select %p379, %s378, 15
        %s381 = smul.u32 %s380, 8
        %s382 = sshra.s32 %s381, 3
        %s383 = sand.u32 %s381, 7
        %s384 = smul.addr %s382, 4
        %s385 = scalar_lea.vmem %s182, %s384
        %v386 = vld [vmem:[%s385] sm:$0xf]
        %v387 = vld [vmem:[%s385 + $0x4] sm:$0xf]
        %v388 = vld [vmem:[%s385 + $0x8] sm:$0xf]
        %v392 = vunpack.c.l.b16 %v386
        %v393 = vunpack.c.l.b16 %v387
        %v394 = vunpack.c.l.b16 %v388
        %v395 = vpack.c.b16 %v393, %v392
        %v396 = vpack.c.b16 %v394, %v394
        %v399 = vsel %vm219, %v396, 0
        %401 = vmatpush.bf16.msra.mxu0 0
        %402 = vmatpush.bf16.msra.mxu0 0
        %403 = vmatpush.bf16.msra.mxu0 0
        %404 = vmatpush.bf16.msra.mxu0 0
        %405 = vmatpush.bf16.msra.mxu0 0
        %406 = vmatpush.bf16.msra.mxu0 0
        %407 = vmatpush.bf16.msra.mxu0 %v399
        %408 = vmatpush.bf16.msra.mxu0 %v395
        %409 = vmatmul.bf16.gmra.mxu0 %v217
        %v410 = vpop.f32.mrf.mxu0
        %v411 = vadd.f32 0.0, %v410
        %v412 = vpop.f32.mrf.mxu0
        %413 = vdwg.mxu0
        %v414 = vadd.f32 %v193, %v411
        %415 = vrot.lane.b32.xlu0 %v395, 127
        %v416 = vpop.permute.xlu0 %415
        %417 = vrot.lane.b32.xlu0 %v396, 127
        %v418 = vpop.permute.xlu0 %417
        %v421 = vsel %vm219, %v418, 0
        %423 = vmatpush.bf16.msra.mxu0 0
        %424 = vmatpush.bf16.msra.mxu0 0
        %425 = vmatpush.bf16.msra.mxu0 0
        %426 = vmatpush.bf16.msra.mxu0 0
        %427 = vmatpush.bf16.msra.mxu0 0
        %428 = vmatpush.bf16.msra.mxu0 0
        %429 = vmatpush.bf16.msra.mxu0 %v421
        %430 = vmatpush.bf16.msra.mxu0 %v416
        %431 = vmatmul.bf16.gmra.mxu0 %v243
        %v432 = vpop.f32.mrf.mxu0
        %v433 = vadd.f32 0.0, %v432
        %v434 = vpop.f32.mrf.mxu0
        %435 = vdwg.mxu0
        %v436 = vadd.f32 %v414, %v433
        %437 = vrot.lane.b32.xlu0 %v395, 126
        %v438 = vpop.permute.xlu0 %437
        %439 = vrot.lane.b32.xlu0 %v396, 126
        %v440 = vpop.permute.xlu0 %439
        %v443 = vsel %vm219, %v440, 0
        %445 = vmatpush.bf16.msra.mxu0 0
        %446 = vmatpush.bf16.msra.mxu0 0
        %447 = vmatpush.bf16.msra.mxu0 0
        %448 = vmatpush.bf16.msra.mxu0 0
        %449 = vmatpush.bf16.msra.mxu0 0
        %450 = vmatpush.bf16.msra.mxu0 0
        %451 = vmatpush.bf16.msra.mxu0 %v443
        %452 = vmatpush.bf16.msra.mxu0 %v438
        %453 = vmatmul.bf16.gmra.mxu0 %v268
        %v454 = vpop.f32.mrf.mxu0
        %v455 = vadd.f32 0.0, %v454
        %v456 = vpop.f32.mrf.mxu0
        %457 = vdwg.mxu0
        %v458 = vadd.f32 %v436, %v455
        %v459 = vmax.f32 %v458, 0.0
        %461 = vrot.lane.b32.xlu0 %v459, 32
        %v462 = vpop.permute.xlu0 %461
        %vm464 = vcmask 392448
        %465 = vst.msk [vmem:[%s177] sm:$0xff] %vm464, %v462
        %s466 = sadd.s32 %s195, 3
        %p467 = scmp.lt.s32.totalorder %s466, 15
        %s468 = scalar_select %p467, %s466, 15
        %s469 = smul.u32 %s468, 8
        %s470 = sshra.s32 %s469, 3
        %s471 = sand.u32 %s469, 7
        %s472 = smul.addr %s470, 4
        %s473 = scalar_lea.vmem %s182, %s472
        %v474 = vld [vmem:[%s473] sm:$0xf]
        %v475 = vld [vmem:[%s473 + $0x4] sm:$0xf]
        %v476 = vld [vmem:[%s473 + $0x8] sm:$0xf]
        %v480 = vunpack.c.l.b16 %v474
        %v481 = vunpack.c.l.b16 %v475
        %v482 = vunpack.c.l.b16 %v476
        %v483 = vpack.c.b16 %v481, %v480
        %v484 = vpack.c.b16 %v482, %v482
        %v487 = vsel %vm219, %v484, 0
        %489 = vmatpush.bf16.msra.mxu0 0
        %490 = vmatpush.bf16.msra.mxu0 0
        %491 = vmatpush.bf16.msra.mxu0 0
        %492 = vmatpush.bf16.msra.mxu0 0
        %493 = vmatpush.bf16.msra.mxu0 0
        %494 = vmatpush.bf16.msra.mxu0 0
        %495 = vmatpush.bf16.msra.mxu0 %v487
        %496 = vmatpush.bf16.msra.mxu0 %v483
        %497 = vmatmul.bf16.gmra.mxu0 %v217
        %v498 = vpop.f32.mrf.mxu0
        %v499 = vadd.f32 0.0, %v498
        %v500 = vpop.f32.mrf.mxu0
        %501 = vdwg.mxu0
        %v502 = vadd.f32 %v193, %v499
        %503 = vrot.lane.b32.xlu0 %v483, 127
        %v504 = vpop.permute.xlu0 %503
        %505 = vrot.lane.b32.xlu0 %v484, 127
        %v506 = vpop.permute.xlu0 %505
        %v509 = vsel %vm219, %v506, 0
        %511 = vmatpush.bf16.msra.mxu0 0
        %512 = vmatpush.bf16.msra.mxu0 0
        %513 = vmatpush.bf16.msra.mxu0 0
        %514 = vmatpush.bf16.msra.mxu0 0
        %515 = vmatpush.bf16.msra.mxu0 0
        %516 = vmatpush.bf16.msra.mxu0 0
        %517 = vmatpush.bf16.msra.mxu0 %v509
        %518 = vmatpush.bf16.msra.mxu0 %v504
        %519 = vmatmul.bf16.gmra.mxu0 %v243
        %v520 = vpop.f32.mrf.mxu0
        %v521 = vadd.f32 0.0, %v520
        %v522 = vpop.f32.mrf.mxu0
        %523 = vdwg.mxu0
        %v524 = vadd.f32 %v502, %v521
        %525 = vrot.lane.b32.xlu0 %v483, 126
        %v526 = vpop.permute.xlu0 %525
        %527 = vrot.lane.b32.xlu0 %v484, 126
        %v528 = vpop.permute.xlu0 %527
        %v531 = vsel %vm219, %v528, 0
        %533 = vmatpush.bf16.msra.mxu0 0
        %534 = vmatpush.bf16.msra.mxu0 0
        %535 = vmatpush.bf16.msra.mxu0 0
        %536 = vmatpush.bf16.msra.mxu0 0
        %537 = vmatpush.bf16.msra.mxu0 0
        %538 = vmatpush.bf16.msra.mxu0 0
        %539 = vmatpush.bf16.msra.mxu0 %v531
        %540 = vmatpush.bf16.msra.mxu0 %v526
        %541 = vmatmul.bf16.gmra.mxu0 %v268
        %v542 = vpop.f32.mrf.mxu0
        %v543 = vadd.f32 0.0, %v542
        %v544 = vpop.f32.mrf.mxu0
        %545 = vdwg.mxu0
        %v546 = vadd.f32 %v524, %v543
        %v547 = vmax.f32 %v546, 0.0
        %549 = vrot.lane.b32.xlu0 %v547, 48
        %v550 = vpop.permute.xlu0 %549
        %vm552 = vcmask 523648
        %553 = vst.msk [vmem:[%s177] sm:$0xff] %vm552, %v550
        %s554 = sadd.s32 %s195, 4
        %p555 = scmp.lt.s32.totalorder %s554, 15
        %s556 = scalar_select %p555, %s554, 15
        %s557 = smul.u32 %s556, 8
        %s558 = sshra.s32 %s557, 3
        %s559 = sand.u32 %s557, 7
        %s560 = smul.addr %s558, 4
        %s561 = scalar_lea.vmem %s182, %s560
        %v562 = vld [vmem:[%s561] sm:$0xf]
        %v563 = vld [vmem:[%s561 + $0x4] sm:$0xf]
        %v564 = vld [vmem:[%s561 + $0x8] sm:$0xf]
        %v568 = vunpack.c.l.b16 %v562
        %v569 = vunpack.c.l.b16 %v563
        %v570 = vunpack.c.l.b16 %v564
        %v571 = vpack.c.b16 %v569, %v568
        %v572 = vpack.c.b16 %v570, %v570
        %v575 = vsel %vm219, %v572, 0
        %577 = vmatpush.bf16.msra.mxu0 0
        %578 = vmatpush.bf16.msra.mxu0 0
        %579 = vmatpush.bf16.msra.mxu0 0
        %580 = vmatpush.bf16.msra.mxu0 0
        %581 = vmatpush.bf16.msra.mxu0 0
        %582 = vmatpush.bf16.msra.mxu0 0
        %583 = vmatpush.bf16.msra.mxu0 %v575
        %584 = vmatpush.bf16.msra.mxu0 %v571
        %585 = vmatmul.bf16.gmra.mxu0 %v217
        %v586 = vpop.f32.mrf.mxu0
        %v587 = vadd.f32 0.0, %v586
        %v588 = vpop.f32.mrf.mxu0
        %589 = vdwg.mxu0
        %v590 = vadd.f32 %v193, %v587
        %591 = vrot.lane.b32.xlu0 %v571, 127
        %v592 = vpop.permute.xlu0 %591
        %593 = vrot.lane.b32.xlu0 %v572, 127
        %v594 = vpop.permute.xlu0 %593
        %v597 = vsel %vm219, %v594, 0
        %599 = vmatpush.bf16.msra.mxu0 0
        %600 = vmatpush.bf16.msra.mxu0 0
        %601 = vmatpush.bf16.msra.mxu0 0
        %602 = vmatpush.bf16.msra.mxu0 0
        %603 = vmatpush.bf16.msra.mxu0 0
        %604 = vmatpush.bf16.msra.mxu0 0
        %605 = vmatpush.bf16.msra.mxu0 %v597
        %606 = vmatpush.bf16.msra.mxu0 %v592
        %607 = vmatmul.bf16.gmra.mxu0 %v243
        %v608 = vpop.f32.mrf.mxu0
        %v609 = vadd.f32 0.0, %v608
        %v610 = vpop.f32.mrf.mxu0
        %611 = vdwg.mxu0
        %v612 = vadd.f32 %v590, %v609
        %613 = vrot.lane.b32.xlu0 %v571, 126
        %v614 = vpop.permute.xlu0 %613
        %615 = vrot.lane.b32.xlu0 %v572, 126
        %v616 = vpop.permute.xlu0 %615
        %v619 = vsel %vm219, %v616, 0
        %621 = vmatpush.bf16.msra.mxu0 0
        %622 = vmatpush.bf16.msra.mxu0 0
        %623 = vmatpush.bf16.msra.mxu0 0
        %624 = vmatpush.bf16.msra.mxu0 0
        %625 = vmatpush.bf16.msra.mxu0 0
        %626 = vmatpush.bf16.msra.mxu0 0
        %627 = vmatpush.bf16.msra.mxu0 %v619
        %628 = vmatpush.bf16.msra.mxu0 %v614
        %629 = vmatmul.bf16.gmra.mxu0 %v268
        %v630 = vpop.f32.mrf.mxu0
        %v631 = vadd.f32 0.0, %v630
        %v632 = vpop.f32.mrf.mxu0
        %633 = vdwg.mxu0
        %v634 = vadd.f32 %v612, %v631
        %v635 = vmax.f32 %v634, 0.0
        %637 = vrot.lane.b32.xlu0 %v635, 64
        %v638 = vpop.permute.xlu0 %637
        %vm640 = vcmask 654848
        %641 = vst.msk [vmem:[%s177] sm:$0xff] %vm640, %v638
        %s642 = sadd.s32 %s195, 5
        %p643 = scmp.lt.s32.totalorder %s642, 15
        %s644 = scalar_select %p643, %s642, 15
        %s645 = smul.u32 %s644, 8
        %s646 = sshra.s32 %s645, 3
        %s647 = sand.u32 %s645, 7
        %s648 = smul.addr %s646, 4
        %s649 = scalar_lea.vmem %s182, %s648
        %v650 = vld [vmem:[%s649] sm:$0xf]
        %v651 = vld [vmem:[%s649 + $0x4] sm:$0xf]
        %v652 = vld [vmem:[%s649 + $0x8] sm:$0xf]
        %v656 = vunpack.c.l.b16 %v650
        %v657 = vunpack.c.l.b16 %v651
        %v658 = vunpack.c.l.b16 %v652
        %v659 = vpack.c.b16 %v657, %v656
        %v660 = vpack.c.b16 %v658, %v658
        %v663 = vsel %vm219, %v660, 0
        %665 = vmatpush.bf16.msra.mxu0 0
        %666 = vmatpush.bf16.msra.mxu0 0
        %667 = vmatpush.bf16.msra.mxu0 0
        %668 = vmatpush.bf16.msra.mxu0 0
        %669 = vmatpush.bf16.msra.mxu0 0
        %670 = vmatpush.bf16.msra.mxu0 0
        %671 = vmatpush.bf16.msra.mxu0 %v663
        %672 = vmatpush.bf16.msra.mxu0 %v659
        %673 = vmatmul.bf16.gmra.mxu0 %v217
        %v674 = vpop.f32.mrf.mxu0
        %v675 = vadd.f32 0.0, %v674
        %v676 = vpop.f32.mrf.mxu0
        %677 = vdwg.mxu0
        %v678 = vadd.f32 %v193, %v675
        %679 = vrot.lane.b32.xlu0 %v659, 127
        %v680 = vpop.permute.xlu0 %679
        %681 = vrot.lane.b32.xlu0 %v660, 127
        %v682 = vpop.permute.xlu0 %681
        %v685 = vsel %vm219, %v682, 0
        %687 = vmatpush.bf16.msra.mxu0 0
        %688 = vmatpush.bf16.msra.mxu0 0
        %689 = vmatpush.bf16.msra.mxu0 0
        %690 = vmatpush.bf16.msra.mxu0 0
        %691 = vmatpush.bf16.msra.mxu0 0
        %692 = vmatpush.bf16.msra.mxu0 0
        %693 = vmatpush.bf16.msra.mxu0 %v685
        %694 = vmatpush.bf16.msra.mxu0 %v680
        %695 = vmatmul.bf16.gmra.mxu0 %v243
        %v696 = vpop.f32.mrf.mxu0
        %v697 = vadd.f32 0.0, %v696
        %v698 = vpop.f32.mrf.mxu0
        %699 = vdwg.mxu0
        %v700 = vadd.f32 %v678, %v697
        %701 = vrot.lane.b32.xlu0 %v659, 126
        %v702 = vpop.permute.xlu0 %701
        %703 = vrot.lane.b32.xlu0 %v660, 126
        %v704 = vpop.permute.xlu0 %703
        %v707 = vsel %vm219, %v704, 0
        %709 = vmatpush.bf16.msra.mxu0 0
        %710 = vmatpush.bf16.msra.mxu0 0
        %711 = vmatpush.bf16.msra.mxu0 0
        %712 = vmatpush.bf16.msra.mxu0 0
        %713 = vmatpush.bf16.msra.mxu0 0
        %714 = vmatpush.bf16.msra.mxu0 0
        %715 = vmatpush.bf16.msra.mxu0 %v707
        %716 = vmatpush.bf16.msra.mxu0 %v702
        %717 = vmatmul.bf16.gmra.mxu0 %v268
        %v718 = vpop.f32.mrf.mxu0
        %v719 = vadd.f32 0.0, %v718
        %v720 = vpop.f32.mrf.mxu0
        %721 = vdwg.mxu0
        %v722 = vadd.f32 %v700, %v719
        %v723 = vmax.f32 %v722, 0.0
        %725 = vrot.lane.b32.xlu0 %v723, 80
        %v726 = vpop.permute.xlu0 %725
        %vm728 = vcmask 786048
        %729 = vst.msk [vmem:[%s177] sm:$0xff] %vm728, %v726
        %s730 = sadd.s32 %s195, 6
        %p731 = scmp.lt.s32.totalorder %s730, 15
        %s732 = scalar_select %p731, %s730, 15
        %s733 = smul.u32 %s732, 8
        %s734 = sshra.s32 %s733, 3
        %s735 = sand.u32 %s733, 7
        %s736 = smul.addr %s734, 4
        %s737 = scalar_lea.vmem %s182, %s736
        %v738 = vld [vmem:[%s737] sm:$0xf]
        %v739 = vld [vmem:[%s737 + $0x4] sm:$0xf]
        %v740 = vld [vmem:[%s737 + $0x8] sm:$0xf]
        %v744 = vunpack.c.l.b16 %v738
        %v745 = vunpack.c.l.b16 %v739
        %v746 = vunpack.c.l.b16 %v740
        %v747 = vpack.c.b16 %v745, %v744
        %v748 = vpack.c.b16 %v746, %v746
        %v751 = vsel %vm219, %v748, 0
        %753 = vmatpush.bf16.msra.mxu0 0
        %754 = vmatpush.bf16.msra.mxu0 0
        %755 = vmatpush.bf16.msra.mxu0 0
        %756 = vmatpush.bf16.msra.mxu0 0
        %757 = vmatpush.bf16.msra.mxu0 0
        %758 = vmatpush.bf16.msra.mxu0 0
        %759 = vmatpush.bf16.msra.mxu0 %v751
        %760 = vmatpush.bf16.msra.mxu0 %v747
        %761 = vmatmul.bf16.gmra.mxu0 %v217
        %v762 = vpop.f32.mrf.mxu0
        %v763 = vadd.f32 0.0, %v762
        %v764 = vpop.f32.mrf.mxu0
        %765 = vdwg.mxu0
        %v766 = vadd.f32 %v193, %v763
        %767 = vrot.lane.b32.xlu0 %v747, 127
        %v768 = vpop.permute.xlu0 %767
        %769 = vrot.lane.b32.xlu0 %v748, 127
        %v770 = vpop.permute.xlu0 %769
        %v773 = vsel %vm219, %v770, 0
        %775 = vmatpush.bf16.msra.mxu0 0
        %776 = vmatpush.bf16.msra.mxu0 0
        %777 = vmatpush.bf16.msra.mxu0 0
        %778 = vmatpush.bf16.msra.mxu0 0
        %779 = vmatpush.bf16.msra.mxu0 0
        %780 = vmatpush.bf16.msra.mxu0 0
        %781 = vmatpush.bf16.msra.mxu0 %v773
        %782 = vmatpush.bf16.msra.mxu0 %v768
        %783 = vmatmul.bf16.gmra.mxu0 %v243
        %v784 = vpop.f32.mrf.mxu0
        %v785 = vadd.f32 0.0, %v784
        %v786 = vpop.f32.mrf.mxu0
        %787 = vdwg.mxu0
        %v788 = vadd.f32 %v766, %v785
        %789 = vrot.lane.b32.xlu0 %v747, 126
        %v790 = vpop.permute.xlu0 %789
        %791 = vrot.lane.b32.xlu0 %v748, 126
        %v792 = vpop.permute.xlu0 %791
        %v795 = vsel %vm219, %v792, 0
        %797 = vmatpush.bf16.msra.mxu0 0
        %798 = vmatpush.bf16.msra.mxu0 0
        %799 = vmatpush.bf16.msra.mxu0 0
        %800 = vmatpush.bf16.msra.mxu0 0
        %801 = vmatpush.bf16.msra.mxu0 0
        %802 = vmatpush.bf16.msra.mxu0 0
        %803 = vmatpush.bf16.msra.mxu0 %v795
        %804 = vmatpush.bf16.msra.mxu0 %v790
        %805 = vmatmul.bf16.gmra.mxu0 %v268
        %v806 = vpop.f32.mrf.mxu0
        %v807 = vadd.f32 0.0, %v806
        %v808 = vpop.f32.mrf.mxu0
        %809 = vdwg.mxu0
        %v810 = vadd.f32 %v788, %v807
        %v811 = vmax.f32 %v810, 0.0
        %813 = vrot.lane.b32.xlu0 %v811, 96
        %v814 = vpop.permute.xlu0 %813
        %vm816 = vcmask 917248
        %817 = vst.msk [vmem:[%s177] sm:$0xff] %vm816, %v814
        %s818 = sadd.s32 %s195, 7
        %p819 = scmp.lt.s32.totalorder %s818, 15
        %s820 = scalar_select %p819, %s818, 15
        %s821 = smul.u32 %s820, 8
        %s822 = sshra.s32 %s821, 3
        %s823 = sand.u32 %s821, 7
        %s824 = smul.addr %s822, 4
        %s825 = scalar_lea.vmem %s182, %s824
        %v826 = vld [vmem:[%s825] sm:$0xf]
        %v827 = vld [vmem:[%s825 + $0x4] sm:$0xf]
        %v828 = vld [vmem:[%s825 + $0x8] sm:$0xf]
        %v832 = vunpack.c.l.b16 %v826
        %v833 = vunpack.c.l.b16 %v827
        %v834 = vunpack.c.l.b16 %v828
        %v835 = vpack.c.b16 %v833, %v832
        %v836 = vpack.c.b16 %v834, %v834
        %v839 = vsel %vm219, %v836, 0
        %841 = vmatpush.bf16.msra.mxu0 0
        %842 = vmatpush.bf16.msra.mxu0 0
        %843 = vmatpush.bf16.msra.mxu0 0
        %844 = vmatpush.bf16.msra.mxu0 0
        %845 = vmatpush.bf16.msra.mxu0 0
        %846 = vmatpush.bf16.msra.mxu0 0
        %847 = vmatpush.bf16.msra.mxu0 %v839
        %848 = vmatpush.bf16.msra.mxu0 %v835
        %849 = vmatmul.bf16.gmra.mxu0 %v217
        %v850 = vpop.f32.mrf.mxu0
        %v851 = vadd.f32 0.0, %v850
        %v852 = vpop.f32.mrf.mxu0
        %853 = vdwg.mxu0
        %v854 = vadd.f32 %v193, %v851
        %855 = vrot.lane.b32.xlu0 %v835, 127
        %v856 = vpop.permute.xlu0 %855
        %857 = vrot.lane.b32.xlu0 %v836, 127
        %v858 = vpop.permute.xlu0 %857
        %v861 = vsel %vm219, %v858, 0
        %863 = vmatpush.bf16.msra.mxu0 0
        %864 = vmatpush.bf16.msra.mxu0 0
        %865 = vmatpush.bf16.msra.mxu0 0
        %866 = vmatpush.bf16.msra.mxu0 0
        %867 = vmatpush.bf16.msra.mxu0 0
        %868 = vmatpush.bf16.msra.mxu0 0
        %869 = vmatpush.bf16.msra.mxu0 %v861
        %870 = vmatpush.bf16.msra.mxu0 %v856
        %871 = vmatmul.bf16.gmra.mxu0 %v243
        %v872 = vpop.f32.mrf.mxu0
        %v873 = vadd.f32 0.0, %v872
        %v874 = vpop.f32.mrf.mxu0
        %875 = vdwg.mxu0
        %v876 = vadd.f32 %v854, %v873
        %877 = vrot.lane.b32.xlu0 %v835, 126
        %v878 = vpop.permute.xlu0 %877
        %879 = vrot.lane.b32.xlu0 %v836, 126
        %v880 = vpop.permute.xlu0 %879
        %v883 = vsel %vm219, %v880, 0
        %885 = vmatpush.bf16.msra.mxu0 0
        %886 = vmatpush.bf16.msra.mxu0 0
        %887 = vmatpush.bf16.msra.mxu0 0
        %888 = vmatpush.bf16.msra.mxu0 0
        %889 = vmatpush.bf16.msra.mxu0 0
        %890 = vmatpush.bf16.msra.mxu0 0
        %891 = vmatpush.bf16.msra.mxu0 %v883
        %892 = vmatpush.bf16.msra.mxu0 %v878
        %893 = vmatmul.bf16.gmra.mxu0 %v268
        %v894 = vpop.f32.mrf.mxu0
        %v895 = vadd.f32 0.0, %v894
        %v896 = vpop.f32.mrf.mxu0
        %897 = vdwg.mxu0
        %v898 = vadd.f32 %v876, %v895
        %v899 = vmax.f32 %v898, 0.0
        %901 = vrot.lane.b32.xlu0 %v899, 112
        %v902 = vpop.permute.xlu0 %901
        %vm904 = vcmask 1048448
        %905 = vst.msk [vmem:[%s177] sm:$0xff] %vm904, %v902
        %s906 = sand.u32 %s107, 1
        %s907 = scalar_lea.sflag [#allocation3], %s906
        %s908 = sand.u32 %s107, 1
        %s909 = smul.addr %s908, 8
        %s910 = scalar_lea.vmem [#allocation2], %s909
        // Predicated region
        $region33: #{tpu_custom_call.1} parent=31 // pred_check
          %p911 = pneg %p117
        $region34: #{tpu_custom_call.1} parent=31 // pred_check_branch
          %913 = sbr.rel (%p911) target = $region36
        $region35: #{tpu_custom_call.1} parent=31 // pred_region
          %915 = vsyncadd %s907, 0
          %s916 = smul.addr %s21, 2
          %s917 = sadd.s32 %s22, %s916
          %s918 = smul.addr %s917, 8
          %s919 = scalar_lea.hbm %s3, %s918
          %s921 = sshll.u32 %s910, 4
          %s922 = int_to_ptr.vmem [resolvable:$true] %s921
          %s923 = sshll.u32 %s919, 4
          %s924 = int_to_ptr.hbm [resolvable:$true] %s923
          %926 = dma.vmem_to_hbm [thread:$0]  %s922, 128, %s924, %s907
        $region36: #{tpu_custom_call.1} parent=31 // pred_fallthru
          _
      $region32: #{tpu_custom_call.1} parent=5 // pred_fallthru
        _
      %p927 = scmp.le.s32.totalorder 2, %s12
      // Predicated region
      $region37: #{tpu_custom_call.1} parent=5 // pred_check
        %p928 = pneg %p927
      $region38: #{tpu_custom_call.1} parent=5 // pred_check_branch
        %930 = sbr.rel (%p928) target = $region40
      $region39: #{tpu_custom_call.1} parent=5 // pred_region
        %s931 = ssub.s32 %s12, 2
        // Predicated region
        $region41: #{tpu_custom_call.1} parent=39 // pred_check
          %p932 = pneg %p123
        $region42: #{tpu_custom_call.1} parent=39 // pred_check_branch
          %934 = sbr.rel (%p932) target = $region44
        $region43: #{tpu_custom_call.1} parent=39 // pred_region
          %s935 = sand.u32 %s108, 1
          %s936 = scalar_lea.sflag [#allocation3], %s935
          %s937 = sand.u32 %s108, 1
          %s938 = smul.addr %s937, 8
          %s939 = scalar_lea.vmem [#allocation2], %s938
          %941 = dma.done %s936, 128
        $region44: #{tpu_custom_call.1} parent=39 // pred_fallthru
          _
      $region40: #{tpu_custom_call.1} parent=5 // pred_fallthru
        _
    $region6: #{tpu_custom_call.1} parent=1 // loop_footer
      %s16 = sadd.s32 1, %s12
    $region7: #{tpu_custom_call.1} parent=1 // loop_footer_branch
      %11 = sbr.rel target = $region3
    $region8: #{tpu_custom_call.1} parent=1 // loop_exit
      _
    %942 = vsyncpa [#allocation3], 1
    %s943 = scalar_lea.sflag [#allocation3], 1
    %944 = vsyncpa %s943, 1

</llo_original>
